<compile_context>
chip_gen: v6e
topology: v6e:2x2x1
jax: 0.10.0
libtpu: 0.0.40
codegen_flags: <defaults>
</compile_context>

<pallas_src>
import math

import jax
import jax.numpy as jnp
from jax.experimental import pallas as pl
from jax.experimental.pallas import tpu as pltpu


def _round_up(x, m):
    return (x + m - 1) // m * m


def _cdiv(a, b):
    return (a + b - 1) // b


def _distmult_kernel(tile_rel_ref, n_valid_ref, lr_ref, w_ref, out_ref):
    # lr_ref: (2, TB, dim_p) [0]=left rows, [1]=right rows; w_ref: (1, dim_p, dim_p)
    # out_ref: (1, 1, TB) f32 (lane-dense scores for this tile)
    del tile_rel_ref  # only consumed by the BlockSpec index_maps
    i = pl.program_id(0)
    n_valid = n_valid_ref[0]

    @pl.when(i < n_valid)
    def _compute():
        lw = jnp.dot(lr_ref[0], w_ref[0],
                     preferred_element_type=jnp.float32)        # (TB, dim_p) MXU
        prod = lw * lr_ref[1].astype(jnp.float32)               # f32 VPU (v5e-safe)
        ones = jnp.ones((1, prod.shape[-1]), dtype=jnp.float32)
        # ones-row contraction: (1, dim_p) x (TB, dim_p) -> (1, TB) lane-dense,
        # avoids the XLU cross-lane reduce + relayout of a (TB,) vector.
        scores = jax.lax.dot_general(
            ones, prod, (((1,), (1,)), ((), ())),
            preferred_element_type=jnp.float32)
        out_ref[...] = scores[None].astype(out_ref.dtype)

    @pl.when(i >= n_valid)
    def _padding_tile():
        out_ref[...] = jnp.zeros_like(out_ref)


def distmult_forward(left_emb, right_emb, r_id, W, *,
                     max_tile_rows=512, compute_dtype=jnp.float32):
    """left_emb, right_emb: (B, dim) f32; r_id: (B,) int; W: (num_rel, dim, dim) f32."""
    B, dim = left_emb.shape
    num_rel = W.shape[0]
    r_id = r_id.astype(jnp.int32)

    # ---- static tiling choices ------------------------------------------------
    dim_p = _round_up(dim, 128)                 # lane-pad the feature dim
    in_bytes = jnp.dtype(compute_dtype).itemsize

    # Batch tile: big (amortize per-step overhead), but keep per-relation
    # padding bounded (~<= B extra rows total) and stay inside a conservative
    # VMEM budget that leaves headroom on v7x's 64 MiB as well as v5e's 16 MiB
    # default scoped limit (we raise the limit explicitly below).
    pad_cap = _round_up(max(2 * B // max(1, num_rel), 8), 8)
    tb = min(max_tile_rows, _round_up(B, 8), pad_cap)

    def _vmem_need(tb_):
        return (2 * (2 * tb_ * dim_p * in_bytes)   # stacked left/right, double-buffered
                + 2 * (dim_p * dim_p * in_bytes)   # W block, double-buffered
                + 2 * (tb_ * 4))                   # (1,1,TB) f32 output, double-buffered

    vmem_budget = 20 * 1024 * 1024
    while _vmem_need(tb) > vmem_budget and tb > 8:
        tb = max(8, _round_up(tb // 2, 8))
    # TODO(synk): for dim >= ~2048 a single W block alone exceeds the budget; a
    # K-tiled ("arbitrary") grid axis with an f32 accumulator scratch is needed.
    vmem_limit = int(min(max(2 * _vmem_need(tb), 32 * 1024 * 1024),
                         48 * 1024 * 1024))

    # Static bound on #tiles after grouping: each non-empty relation wastes at
    # most one partial tile.
    max_tiles = _cdiv(B, tb) + min(num_rel, B)
    padded_rows = max_tiles * tb

    # ---- group the batch by relation (plain XLA ops in the wrapper) ----------
    order = jnp.argsort(r_id)                               # original row of sorted row j
    r_sorted = r_id[order]

    counts = jnp.bincount(r_sorted, length=num_rel)         # rows per relation
    row_start = jnp.cumsum(counts) - counts                 # first sorted row per relation
    tiles_per_rel = -(-counts // tb)                        # ceil(counts / tb)
    tile_start = jnp.cumsum(tiles_per_rel) - tiles_per_rel  # first tile per relation
    n_valid_tiles = jnp.sum(tiles_per_rel).astype(jnp.int32)

    # Relation served by each tile (trailing padding tiles clip to the last rel).
    tile_idx = jnp.arange(max_tiles, dtype=jnp.int32)
    tile_rel = jnp.searchsorted(jnp.cumsum(tiles_per_rel), tile_idx, side="right")
    tile_rel = jnp.clip(tile_rel, 0, num_rel - 1).astype(jnp.int32)

    # Padded row p = (tile t, slot s)  ->  original batch row feeding it.
    p = jnp.arange(padded_rows, dtype=jnp.int32)
    t = p // tb
    s = p % tb
    rel_p = tile_rel[t]
    local = (t - tile_start[rel_p]) * tb + s                # row index within its group
    valid = local < counts[rel_p]
    sorted_src = jnp.where(valid, row_start[rel_p] + local, 0)
    row_src = order[sorted_src]                             # (padded_rows,)

    # Lane-pad embeddings / W, then stack left & right so each tile is ONE DMA.
    if dim_p != dim:
        pad2 = ((0, 0), (0, dim_p - dim))
        left_emb = jnp.pad(left_emb, pad2)
        right_emb = jnp.pad(right_emb, pad2)
        W = jnp.pad(W, ((0, 0), (0, dim_p - dim), (0, dim_p - dim)))
    lr = jnp.stack([left_emb, right_emb], axis=0)[:, row_src, :]   # (2, padded_rows, dim_p)
    lr = lr.astype(compute_dtype)
    W = W.astype(compute_dtype)
    n_valid_arr = n_valid_tiles.reshape((1,))

    # ---- relation-grouped batched matmul on the MXU ---------------------------
    # Trailing padding tiles clamp their input block indices to the last valid
    # tile (no extra HBM traffic) and skip compute inside the kernel.
    grid_spec = pltpu.PrefetchScalarGridSpec(
        num_scalar_prefetch=2,
        grid=(max_tiles,),
        in_specs=[
            pl.BlockSpec((2, tb, dim_p),
                         lambda i, tr, nv: (0, jnp.minimum(i, nv[0] - 1), 0)),
            pl.BlockSpec((1, dim_p, dim_p),
                         lambda i, tr, nv: (tr[jnp.minimum(i, nv[0] - 1)], 0, 0)),
        ],
        out_specs=pl.BlockSpec((1, 1, tb), lambda i, tr, nv: (i, 0, 0)),
    )

    out_padded = pl.pallas_call(
        _distmult_kernel,
        out_shape=jax.ShapeDtypeStruct((max_tiles, 1, tb), jnp.float32),
        grid_spec=grid_spec,
        compiler_params=pltpu.CompilerParams(
            dimension_semantics=("parallel",),
            vmem_limit_bytes=vmem_limit),
    )(tile_rel, n_valid_arr, lr, W)

    out_flat = out_padded.reshape(padded_rows)

    # ---- undo the grouping: sorted row j -> padded slot that holds it --------
    j = jnp.arange(B, dtype=jnp.int32)
    loc_j = j - row_start[r_sorted]
    pad_pos = (tile_start[r_sorted] + loc_j // tb) * tb + loc_j % tb
    out = jnp.zeros((B,), jnp.float32).at[order].set(out_flat[pad_pos])
    return out                                              # torch .squeeze() -> (B,)


def xavier_normal_3d(key, num_rel, dim, gain):
    # Matches nn.init.xavier_normal_ on a (num_rel, dim, dim) tensor:
    # fan_in = size(1)*prod(shape[2:]) = dim*dim, fan_out = size(0)*prod(shape[2:]) = num_rel*dim
    fan_in = dim * dim
    fan_out = num_rel * dim
    std = gain * math.sqrt(2.0 / (fan_in + fan_out))
    return std * jax.random.normal(key, (num_rel, dim, dim), dtype=jnp.float32)


if __name__ == "__main__":
    def run_case(key, B, num_rel, dim, compute_dtype=jnp.float32,
                 atol=1e-4, rtol=1e-4):
        k_w, k_l, k_r, k_id = jax.random.split(key, 4)
        W = xavier_normal_3d(k_w, num_rel, dim, gain=1.414)
        left_emb = jax.random.normal(k_l, (B, dim), dtype=jnp.float32)
        right_emb = jax.random.normal(k_r, (B, dim), dtype=jnp.float32)
        r_id = jax.random.randint(k_id, (B,), 0, num_rel, dtype=jnp.int32)

        out = distmult_forward(left_emb, right_emb, r_id, W,
                               compute_dtype=compute_dtype)
        out = jax.block_until_ready(out)

        # Pure-JAX f32 reference for sanity check.
        ref = jnp.einsum("bi,bij,bj->b", left_emb, W[r_id], right_emb)
        assert out.shape == (B,)
        assert jnp.allclose(out, ref, atol=atol, rtol=rtol), (out, ref)

    key = jax.random.PRNGKey(0)
    k1, k2, k3 = jax.random.split(key, 3)
    run_case(k1, B=8, num_rel=4, dim=32)     # tiny case matching the module's usage
    run_case(k2, B=37, num_rel=3, dim=64)    # ragged batch / uneven relation groups
    # bf16 operands (halved HBM/VMEM traffic), f32 accumulation -> loose tolerance.
    run_case(k3, B=64, num_rel=5, dim=48,
             compute_dtype=jnp.bfloat16, atol=0.25, rtol=0.1)

    print("KERNEL_OK")
</pallas_src>

<mosaic_0001>
module attributes {stable_mosaic.version = 11 : i64} {
  func.func @_distmult_kernel(%arg0: i32, %arg1: memref<5xi32, #tpu.memory_space<smem>>, %arg2: memref<1xi32, #tpu.memory_space<smem>>, %arg3: memref<2x8x128xf32, #tpu.memory_space<vmem>>, %arg4: memref<1x128x128xf32, #tpu.memory_space<vmem>>, %arg5: memref<1x1x8xf32, #tpu.memory_space<vmem>>) attributes {dimension_semantics = [#tpu.dimension_semantics<parallel>], iteration_bounds = array<i64: 5>, scalar_prefetch = 2 : i64, scratch_operands = 0 : i64, tpu.core_type = #tpu.core_type<tc>, window_params = [{transform_indices = @transform_0, window_bounds = array<i64: 2, 8, 128>}, {transform_indices = @transform_1, window_bounds = array<i64: 1, 128, 128>}, {transform_indices = @transform_2, window_bounds = array<i64: 1, 1, 8>}]} {
    %c0 = arith.constant 0 : index
    %0 = memref.load %arg2[%c0] : memref<1xi32, #tpu.memory_space<smem>>
    %1 = arith.cmpi slt, %arg0, %0 : i32
    %2 = arith.extui %1 : i1 to i32
    %c0_i32 = arith.constant 0 : i32
    %3 = arith.cmpi ne, %2, %c0_i32 : i32
    scf.if %3 {
      %c0_1 = arith.constant 0 : index
      %c0_2 = arith.constant 0 : index
      %c0_3 = arith.constant 0 : index
      %7 = vector.load %arg3[%c0_1, %c0_2, %c0_3] : memref<2x8x128xf32, #tpu.memory_space<vmem>>, vector<1x8x128xf32>
      %8 = vector.shape_cast %7 : vector<1x8x128xf32> to vector<8x128xf32>
      %c0_4 = arith.constant 0 : index
      %c0_5 = arith.constant 0 : index
      %c0_6 = arith.constant 0 : index
      %9 = vector.load %arg4[%c0_4, %c0_5, %c0_6] : memref<1x128x128xf32, #tpu.memory_space<vmem>>, vector<1x128x128xf32>
      %10 = vector.shape_cast %9 : vector<1x128x128xf32> to vector<128x128xf32>
      %cst = arith.constant dense<0.000000e+00> : vector<8x128xf32>
      %11 = tpu.matmul %8, %10, %cst {dimension_numbers = #tpu.dot_dimension_numbers<[1], [0], [0], [1], [0, 0, 1, 1], [], []>} : vector<8x128xf32>, vector<128x128xf32>, vector<8x128xf32> -> vector<8x128xf32>
      %c1 = arith.constant 1 : index
      %c0_7 = arith.constant 0 : index
      %c0_8 = arith.constant 0 : index
      %12 = vector.load %arg3[%c1, %c0_7, %c0_8] : memref<2x8x128xf32, #tpu.memory_space<vmem>>, vector<1x8x128xf32>
      %13 = vector.shape_cast %12 : vector<1x8x128xf32> to vector<8x128xf32>
      %14 = arith.mulf %11, %13 : vector<8x128xf32>
      %cst_9 = arith.constant 1.000000e+00 : f32
      %15 = vector.broadcast %cst_9 : f32 to vector<1x128xf32>
      %cst_10 = arith.constant dense<0.000000e+00> : vector<1x8xf32>
      %16 = tpu.matmul %15, %14, %cst_10 {dimension_numbers = #tpu.dot_dimension_numbers<[1], [1], [0], [0], [0, 0, 1, 0], [], []>} : vector<1x128xf32>, vector<8x128xf32>, vector<1x8xf32> -> vector<1x8xf32>
      %17 = vector.shape_cast %16 : vector<1x8xf32> to vector<1x1x8xf32>
      %c0_11 = arith.constant 0 : index
      %c0_12 = arith.constant 0 : index
      %c0_13 = arith.constant 0 : index
      %18 = vector.load %arg5[%c0_11, %c0_12, %c0_13] : memref<1x1x8xf32, #tpu.memory_space<vmem>>, vector<1x1x8xf32>
      tpu.vector_store %arg5[%c0_11, %c0_12, %c0_13], %17 {strides = array<i32>} : memref<1x1x8xf32, #tpu.memory_space<vmem>>, vector<1x1x8xf32>,
    } else {
    }
    %4 = arith.cmpi sge, %arg0, %0 : i32
    %5 = arith.extui %4 : i1 to i32
    %c0_i32_0 = arith.constant 0 : i32
    %6 = arith.cmpi ne, %5, %c0_i32_0 : i32
    scf.if %6 {
      %cst = arith.constant 0.000000e+00 : f32
      %7 = vector.broadcast %cst : f32 to vector<1x1x8xf32>
      %c0_1 = arith.constant 0 : index
      %c0_2 = arith.constant 0 : index
      %c0_3 = arith.constant 0 : index
      %8 = vector.load %arg5[%c0_1, %c0_2, %c0_3] : memref<1x1x8xf32, #tpu.memory_space<vmem>>, vector<1x1x8xf32>
      tpu.vector_store %arg5[%c0_1, %c0_2, %c0_3], %7 {strides = array<i32>} : memref<1x1x8xf32, #tpu.memory_space<vmem>>, vector<1x1x8xf32>,
    } else {
    }
    return
  }
  func.func @transform_0(%arg0: i32, %arg1: memref<5xi32, #tpu.memory_space<smem>>, %arg2: memref<1xi32, #tpu.memory_space<smem>>) -> (i32, i32, i32) {
    %c0 = arith.constant 0 : index
    %0 = memref.load %arg2[%c0] : memref<1xi32, #tpu.memory_space<smem>>
    %c1_i32 = arith.constant 1 : i32
    %1 = arith.subi %0, %c1_i32 : i32
    %2 = arith.minsi %arg0, %1 : i32
    %c0_i32 = arith.constant 0 : i32
    %c0_i32_0 = arith.constant 0 : i32
    %c0_i32_1 = arith.constant 0 : i32
    return %c0_i32, %2, %c0_i32_0 : i32, i32, i32
  }
  func.func @transform_1(%arg0: i32, %arg1: memref<5xi32, #tpu.memory_space<smem>>, %arg2: memref<1xi32, #tpu.memory_space<smem>>) -> (i32, i32, i32) {
    %c0 = arith.constant 0 : index
    %0 = memref.load %arg2[%c0] : memref<1xi32, #tpu.memory_space<smem>>
    %c1_i32 = arith.constant 1 : i32
    %1 = arith.subi %0, %c1_i32 : i32
    %2 = arith.minsi %arg0, %1 : i32
    %3 = arith.index_cast %2 : i32 to index
    %4 = memref.load %arg1[%3] : memref<5xi32, #tpu.memory_space<smem>>
    %c0_i32 = arith.constant 0 : i32
    %c0_i32_0 = arith.constant 0 : i32
    %c0_i32_1 = arith.constant 0 : i32
    return %4, %c0_i32, %c0_i32_0 : i32, i32, i32
  }
  func.func @transform_2(%arg0: i32, %arg1: memref<5xi32, #tpu.memory_space<smem>>, %arg2: memref<1xi32, #tpu.memory_space<smem>>) -> (i32, i32, i32) {
    %c0_i32 = arith.constant 0 : i32
    %c0_i32_0 = arith.constant 0 : i32
    %c0_i32_1 = arith.constant 0 : i32
    return %arg0, %c0_i32, %c0_i32_0 : i32, i32, i32
  }
}

</mosaic_0001>

<llo_original>
// kernel: tpu_custom_call.1
$region0: #{tpu_custom_call.1}
  #allocation0 [shape = 'u32[]', space=smem, size = 0x4, offset = 0x4, fixed_abs, tag = 'smem constant byte address 0x4 - core index']
  #allocation1 [shape = 'u32[144,128]{1,0:T(1,128)}', space=vmem, size = 0x12000, scoped, tag = 'internal scratch']
  #allocation2 [shape = 's32[1]{0}', space=sflag, size = 0x4, scoped, tag = 'scoped memory for tpu_custom_call.1']
  #allocation3 [shape = 'u8[512]{0}', space=smem, size = 0x200, scoped, tag = 'prefetched SMEM operand 0']
  #allocation4 [shape = 's32[1]{0:T(128)S(6)}', space=smem, size = 0x200, scoped, tag = 'prefetched SMEM operand 1']
  %s0 = inlined_call_operand.vmem [shape: s32[5], index: 0, kind: input, shape index: {}]
  %s1 = inlined_call_operand.<no memory space> [shape: s32[1], index: 1, kind: input, shape index: {}]
  %s2 = inlined_call_operand.hbm [shape: f32[2,40,128], index: 2, kind: input, shape index: {}]
  %s3 = inlined_call_operand.hbm [shape: f32[4,128,128], index: 3, kind: input, shape index: {}]
  %s4 = inlined_call_operand.hbm [shape: f32[5,1,8], index: 4, kind: output, shape index: {}]
  %s5 = sld [smem:[#allocation0]]
  $region57: #{tpu_custom_call.1} parent=0
    _
  %s7 = ssub.s32 1, %s5
  %s8 = scalar_select 0, %s7, %s5
  %s9 = sshll.u32 %s0, 4
  %s10 = int_to_ptr.vmem [resolvable:$true] %s9
  %12 = dma.vmem_to_smem %s10, 16, [#allocation3], [#allocation2]
  %13 = sst [smem:[#allocation4]] %s1
  %14 = dma.done [#allocation2], 16
  %15 = sfence
  $region1: #{tpu_custom_call.1} parent=0
    #allocation5 [shape = 'u8[16384]{0}', space=vmem, size = 0x4000, scoped, tag = 'input window, operand 2']
    #allocation6 [shape = 's32[2]{0}', space=sflag, size = 0x8, scoped, tag = 'scoped memory for tpu_custom_call.1']
    #allocation7 [shape = 's32[2]{0}', space=sflag, size = 0x8, scoped, tag = 'scoped memory for tpu_custom_call.1']
    #allocation8 [shape = 'u8[131072]{0}', space=vmem, size = 0x20000, scoped, tag = 'input window, operand 3']
    #allocation9 [shape = 's32[2]{0}', space=sflag, size = 0x8, scoped, tag = 'scoped memory for tpu_custom_call.1']
    #allocation10 [shape = 'u8[1024]{0}', space=vmem, size = 0x400, scoped, tag = 'output window, operand 0']
    %16 = vsyncpa [#allocation6], 0
    %s17 = scalar_lea.sflag [#allocation6], 1
    %18 = vsyncpa %s17, 0
    %19 = vsyncpa [#allocation9], 0
    %s20 = scalar_lea.sflag [#allocation9], 1
    %21 = vsyncpa %s20, 0
    %22 = vsyncpa [#allocation7], 0
    %s23 = scalar_lea.sflag [#allocation7], 1
    %24 = vsyncpa %s23, 0
    loop: start=0, step=1, limit=7
    $region2: #{tpu_custom_call.1} parent=1 // loop_pre_header
      _
    $region3: #{tpu_custom_call.1} parent=1 // loop_header
      %s26 = sphi 0, %s30
      %p27 = scmp.ge.s32.totalorder %s26, 7
      %s44 = sphi 0, %s46
      %s47 = sphi 0, %s44
      %s48 = sphi 0, %s47
      %s64 = sphi 0, %s48
      %s80 = sphi 0, %s82
      %s83 = sphi 0, %s80
      %s84 = sphi 0, %s83
      %s100 = sphi 0, %s84
      %s106 = sphi 0, %s108
      %s109 = sphi 0, %s106
      %s110 = sphi 0, %s109
      %s126 = sphi 0, %s110
    $region4: #{tpu_custom_call.1} parent=1 // loop_header_branch
      %29 = sbr.rel (%p27) target = $region8
    $region5: #{tpu_custom_call.1} parent=1 // loop_body
      %s31 = ssub.s32 %s26, 1
      %s32 = ssub.s32 %s26, 2
      %s33 = sadd.s32 %s26, 1
      %s34 = sld [smem:[#allocation4]]
      %s35 = ssub.s32 %s34, 1
      %p36 = scmp.lt.s32.totalorder %s26, %s35
      %s37 = scalar_select %p36, %s26, %s35
      %s38 = sld [smem:[#allocation4]]
      %s39 = ssub.s32 %s38, 1
      %p40 = scmp.lt.s32.totalorder %s33, %s39
      %s41 = scalar_select %p40, %s33, %s39
      %s42 = ssub.s32 %s37, %s41
      %p43 = scmp.eq.s32.totalorder %s42, 0
      %s45 = sadd.s32 %s44, 1
      %s46 = scalar_select %p43, %s44, %s45
      %p49 = pneg %p43
      %p50 = scmp.eq.s32.totalorder %s26, 4
      %p51 = por %p49, %p50
      %p52 = scmp.ne.s32.totalorder %s44, %s47
      %p53 = scmp.eq.s32.totalorder %s26, 0
      %p54 = por %p52, %p53
      %p55 = scmp.ne.s32.totalorder %s44, %s47
      %p56 = scmp.eq.s32.totalorder %s31, 4
      %p57 = por %p55, %p56
      %p58 = scmp.ne.s32.totalorder %s47, %s48
      %p59 = scmp.eq.s32.totalorder %s31, 0
      %p60 = por %p58, %p59
      %p61 = scmp.ne.s32.totalorder %s47, %s48
      %p62 = scmp.eq.s32.totalorder %s32, 4
      %p63 = por %p61, %p62
      %p65 = scmp.ne.s32.totalorder %s48, %s64
      %p66 = scmp.eq.s32.totalorder %s32, 0
      %p67 = por %p65, %p66
      %s68 = sld [smem:[#allocation4]]
      %s69 = ssub.s32 %s68, 1
      %p70 = scmp.lt.s32.totalorder %s26, %s69
      %s71 = scalar_select %p70, %s26, %s69
      %s72 = sld [smem:[#allocation3 + %s71]]
      %s73 = sld [smem:[#allocation4]]
      %s74 = ssub.s32 %s73, 1
      %p75 = scmp.lt.s32.totalorder %s33, %s74
      %s76 = scalar_select %p75, %s33, %s74
      %s77 = sld [smem:[#allocation3 + %s76]]
      %s78 = ssub.s32 %s72, %s77
      %p79 = scmp.eq.s32.totalorder %s78, 0
      %s81 = sadd.s32 %s80, 1
      %s82 = scalar_select %p79, %s80, %s81
      %p85 = pneg %p79
      %p86 = scmp.eq.s32.totalorder %s26, 4
      %p87 = por %p85, %p86
      %p88 = scmp.ne.s32.totalorder %s80, %s83
      %p89 = scmp.eq.s32.totalorder %s26, 0
      %p90 = por %p88, %p89
      %p91 = scmp.ne.s32.totalorder %s80, %s83
      %p92 = scmp.eq.s32.totalorder %s31, 4
      %p93 = por %p91, %p92
      %p94 = scmp.ne.s32.totalorder %s83, %s84
      %p95 = scmp.eq.s32.totalorder %s31, 0
      %p96 = por %p94, %p95
      %p97 = scmp.ne.s32.totalorder %s83, %s84
      %p98 = scmp.eq.s32.totalorder %s32, 4
      %p99 = por %p97, %p98
      %p101 = scmp.ne.s32.totalorder %s84, %s100
      %p102 = scmp.eq.s32.totalorder %s32, 0
      %p103 = por %p101, %p102
      %s104 = ssub.s32 %s26, %s33
      %p105 = scmp.eq.s32.totalorder %s104, 0
      %s107 = sadd.s32 %s106, 1
      %s108 = scalar_select %p105, %s106, %s107
      %p111 = pneg %p105
      %p112 = scmp.eq.s32.totalorder %s26, 4
      %p113 = por %p111, %p112
      %p114 = scmp.ne.s32.totalorder %s106, %s109
      %p115 = scmp.eq.s32.totalorder %s26, 0
      %p116 = por %p114, %p115
      %p117 = scmp.ne.s32.totalorder %s106, %s109
      %p118 = scmp.eq.s32.totalorder %s31, 4
      %p119 = por %p117, %p118
      %p120 = scmp.ne.s32.totalorder %s109, %s110
      %p121 = scmp.eq.s32.totalorder %s31, 0
      %p122 = por %p120, %p121
      %p123 = scmp.ne.s32.totalorder %s109, %s110
      %p124 = scmp.eq.s32.totalorder %s32, 4
      %p125 = por %p123, %p124
      %p127 = scmp.ne.s32.totalorder %s110, %s126
      %p128 = scmp.eq.s32.totalorder %s32, 0
      %p129 = por %p127, %p128
      %p130 = scmp.le.s32.totalorder 1, %s26
      %p131 = scmp.lt.s32.totalorder %s26, 6
      %p132 = pnand %p130, %p131
      %p133 = pneg %p132
      // Predicated region
      $region9: #{tpu_custom_call.1} parent=5 // pred_check
        _
      $region10: #{tpu_custom_call.1} parent=5 // pred_check_branch
        %135 = sbr.rel (%p132) target = $region12
      $region11: #{tpu_custom_call.1} parent=5 // pred_region
        %s136 = ssub.s32 %s26, 1
      $region12: #{tpu_custom_call.1} parent=5 // pred_fallthru
        _
      %p137 = scmp.lt.s32.totalorder %s26, 5
      // Predicated region
      $region13: #{tpu_custom_call.1} parent=5 // pred_check
        %p138 = pneg %p137
      $region14: #{tpu_custom_call.1} parent=5 // pred_check_branch
        %140 = sbr.rel (%p138) target = $region16
      $region15: #{tpu_custom_call.1} parent=5 // pred_region
        // Predicated region
        $region17: #{tpu_custom_call.1} parent=15 // pred_check
          %p141 = pneg %p54
        $region18: #{tpu_custom_call.1} parent=15 // pred_check_branch
          %143 = sbr.rel (%p141) target = $region20
        $region19: #{tpu_custom_call.1} parent=15 // pred_region
          %s144 = sand.u32 %s44, 1
          %s145 = scalar_lea.sflag [#allocation6], %s144
          %s146 = sand.u32 %s44, 1
          %s147 = smul.addr %s146, 16
          %s148 = scalar_lea.vmem [#allocation5], %s147
          %s149 = sld [smem:[#allocation4]]
          %s150 = ssub.s32 %s149, 1
          %p151 = scmp.lt.s32.totalorder %s26, %s150
          %s152 = scalar_select %p151, %s26, %s150
          %s154 = ssub.s32 256, 256
          %155 = vsyncadd %s145, %s154
          %s156 = smul.addr %s152, 128
          %s157 = scalar_lea.hbm %s2, %s156
          %s158 = sshll.u32 %s148, 4
          %s159 = int_to_ptr.vmem [resolvable:$true] %s158
          %164 = dma.hbm_to_vmem [thread:$0]  %s157, 256, %s159, %s145, 640, 128, 8
        $region20: #{tpu_custom_call.1} parent=15 // pred_fallthru
          _
        // Predicated region
        $region21: #{tpu_custom_call.1} parent=15 // pred_check
          %p165 = pneg %p90
        $region22: #{tpu_custom_call.1} parent=15 // pred_check_branch
          %167 = sbr.rel (%p165) target = $region24
        $region23: #{tpu_custom_call.1} parent=15 // pred_region
          %s168 = sand.u32 %s80, 1
          %s169 = scalar_lea.sflag [#allocation9], %s168
          %s170 = sand.u32 %s80, 1
          %s171 = smul.addr %s170, 128
          %s172 = scalar_lea.vmem [#allocation8], %s171
          %s173 = sld [smem:[#allocation4]]
          %s174 = ssub.s32 %s173, 1
          %p175 = scmp.lt.s32.totalorder %s26, %s174
          %s176 = scalar_select %p175, %s26, %s174
          %s177 = sld [smem:[#allocation3 + %s176]]
          %s179 = ssub.s32 2048, 2048
          %180 = vsyncadd %s169, %s179
          %s181 = smul.addr %s177, 16
          %s182 = smul.addr %s181, 128
          %s183 = scalar_lea.hbm %s3, %s182
          %s184 = sshll.u32 %s172, 4
          %s185 = int_to_ptr.vmem [resolvable:$true] %s184
          %190 = dma.hbm_to_vmem [thread:$0]  %s183, 2048, %s185, %s169, 128, 128, 8
        $region24: #{tpu_custom_call.1} parent=15 // pred_fallthru
          _
      $region16: #{tpu_custom_call.1} parent=5 // pred_fallthru
        _
      %p191 = scmp.le.s32.totalorder 1, %s26
      %p192 = scmp.lt.s32.totalorder %s26, 6
      %p193 = pnand %p191, %p192
      %p194 = pneg %p193
      // Predicated region
      $region25: #{tpu_custom_call.1} parent=5 // pred_check
        _
      $region26: #{tpu_custom_call.1} parent=5 // pred_check_branch
        %196 = sbr.rel (%p193) target = $region28
      $region27: #{tpu_custom_call.1} parent=5 // pred_region
        %s197 = ssub.s32 %s26, 1
        %s198 = sand.u32 %s47, 1
        %s199 = scalar_lea.sflag [#allocation6], %s198
        %s200 = sand.u32 %s47, 1
        %s201 = smul.addr %s200, 16
        %s202 = scalar_lea.vmem [#allocation5], %s201
        // Predicated region
        $region29: #{tpu_custom_call.1} parent=27 // pred_check
          %p203 = pneg %p60
        $region30: #{tpu_custom_call.1} parent=27 // pred_check_branch
          %205 = sbr.rel (%p203) target = $region32
        $region31: #{tpu_custom_call.1} parent=27 // pred_region
          %206 = dma.done %s199, 256
        $region32: #{tpu_custom_call.1} parent=27 // pred_fallthru
          _
        %s207 = sand.u32 %s83, 1
        %s208 = scalar_lea.sflag [#allocation9], %s207
        %s209 = sand.u32 %s83, 1
        %s210 = smul.addr %s209, 128
        %s211 = scalar_lea.vmem [#allocation8], %s210
        // Predicated region
        $region33: #{tpu_custom_call.1} parent=27 // pred_check
          %p212 = pneg %p96
        $region34: #{tpu_custom_call.1} parent=27 // pred_check_branch
          %214 = sbr.rel (%p212) target = $region36
        $region35: #{tpu_custom_call.1} parent=27 // pred_region
          %215 = dma.done %s208, 2048
        $region36: #{tpu_custom_call.1} parent=27 // pred_fallthru
          _
        %s216 = sand.u32 %s47, 1
        %s217 = scalar_lea.sflag [#allocation6], %s216
        %s218 = sand.u32 %s47, 1
        %s219 = smul.addr %s218, 16
        %s220 = scalar_lea.vmem [#allocation5], %s219
        %p221 = pneg %p60
        %p222 = pneg %p57
        %s223 = sand.u32 %s83, 1
        %s224 = scalar_lea.sflag [#allocation9], %s223
        %s225 = sand.u32 %s83, 1
        %s226 = smul.addr %s225, 128
        %s227 = scalar_lea.vmem [#allocation8], %s226
        %p228 = pneg %p96
        %p229 = pneg %p93
        %p230 = pneg %p122
        %p231 = pneg %p119
        %s232 = sand.u32 %s109, 1
        %s233 = scalar_lea.sflag [#allocation7], %s232
        %s234 = sand.u32 %s109, 1
        %s235 = scalar_lea.vmem [#allocation10], %s234
        %s236 = sld [smem:[#allocation4]]
        %s237 = ssub.s32 %s236, 1
        %p238 = scmp.lt.s32.totalorder %s31, %s237
        %s239 = scalar_select %p238, %s31, %s237
        %s240 = sld [smem:[#allocation4]]
        %s241 = ssub.s32 %s240, 1
        %p242 = scmp.lt.s32.totalorder %s31, %s241
        %s243 = scalar_select %p242, %s31, %s241
        %s244 = sld [smem:[#allocation3 + %s243]]
        %s245 = sld [smem:[#allocation4]]
        %p246 = scmp.lt.s32.totalorder %s31, %s245
        // Predicated region
        $region37: #{tpu_custom_call.1} parent=27 // pred_check
          %p247 = pneg %p246
        $region38: #{tpu_custom_call.1} parent=27 // pred_check_branch
          %249 = sbr.rel (%p247) target = $region40
        $region39: #{tpu_custom_call.1} parent=27 // pred_region
          %v250 = vld [vmem:[%s202] sm:$0xff]
          %v251 = vld [vmem:[%s211] sm:$0xff]
          %v252 = vld [vmem:[%s211 + $0x8] sm:$0xff]
          %v253 = vld [vmem:[%s211 + $0x10] sm:$0xff]
          %v254 = vld [vmem:[%s211 + $0x18] sm:$0xff]
          %v255 = vld [vmem:[%s211 + $0x20] sm:$0xff]
          %v256 = vld [vmem:[%s211 + $0x28] sm:$0xff]
          %v257 = vld [vmem:[%s211 + $0x30] sm:$0xff]
          %v258 = vld [vmem:[%s211 + $0x38] sm:$0xff]
          %v259 = vld [vmem:[%s211 + $0x40] sm:$0xff]
          %v260 = vld [vmem:[%s211 + $0x48] sm:$0xff]
          %v261 = vld [vmem:[%s211 + $0x50] sm:$0xff]
          %v262 = vld [vmem:[%s211 + $0x58] sm:$0xff]
          %v263 = vld [vmem:[%s211 + $0x60] sm:$0xff]
          %v264 = vld [vmem:[%s211 + $0x68] sm:$0xff]
          %v265 = vld [vmem:[%s211 + $0x70] sm:$0xff]
          %v266 = vld [vmem:[%s211 + $0x78] sm:$0xff]
          %267 = vmatprep.subr.mxu0 0.0
          %268 = vmatpush1.msra.mxu0 %v266
          %269 = vmatprep.subr.mxu0 0.0
          %270 = vmatpush1.msra.mxu0 %v265
          %271 = vmatprep.subr.mxu0 0.0
          %272 = vmatpush1.msra.mxu0 %v264
          %273 = vmatprep.subr.mxu0 0.0
          %274 = vmatpush1.msra.mxu0 %v263
          %275 = vmatprep.subr.mxu0 0.0
          %276 = vmatpush1.msra.mxu0 %v262
          %277 = vmatprep.subr.mxu0 0.0
          %278 = vmatpush1.msra.mxu0 %v261
          %279 = vmatprep.subr.mxu0 0.0
          %280 = vmatpush1.msra.mxu0 %v260
          %281 = vmatprep.subr.mxu0 0.0
          %282 = vmatpush1.msra.mxu0 %v259
          %283 = vmatprep.subr.mxu0 0.0
          %284 = vmatpush1.msra.mxu0 %v258
          %285 = vmatprep.subr.mxu0 0.0
          %286 = vmatpush1.msra.mxu0 %v257
          %287 = vmatprep.subr.mxu0 0.0
          %288 = vmatpush1.msra.mxu0 %v256
          %289 = vmatprep.subr.mxu0 0.0
          %290 = vmatpush1.msra.mxu0 %v255
          %291 = vmatprep.subr.mxu0 0.0
          %292 = vmatpush1.msra.mxu0 %v254
          %293 = vmatprep.subr.mxu0 0.0
          %294 = vmatpush1.msra.mxu0 %v253
          %295 = vmatprep.subr.mxu0 0.0
          %296 = vmatpush1.msra.mxu0 %v252
          %297 = vmatprep.subr.mxu0 0.0
          %298 = vmatpush1.msra.mxu0 %v251
          %299 = vmatprep.subr.mxu0 0.0
          %300 = vmatpush2.msra.mxu0 0.0
          %301 = vmatprep.subr.mxu0 0.0
          %302 = vmatpush2.msra.mxu0 0.0
          %303 = vmatprep.subr.mxu0 0.0
          %304 = vmatpush2.msra.mxu0 0.0
          %305 = vmatprep.subr.mxu0 0.0
          %306 = vmatpush2.msra.mxu0 0.0
          %307 = vmatprep.subr.mxu0 0.0
          %308 = vmatpush2.msra.mxu0 0.0
          %309 = vmatprep.subr.mxu0 0.0
          %310 = vmatpush2.msra.mxu0 0.0
          %311 = vmatprep.subr.mxu0 0.0
          %312 = vmatpush2.msra.mxu0 0.0
          %313 = vmatprep.subr.mxu0 0.0
          %314 = vmatpush2.msra.mxu0 0.0
          %315 = vmatprep.subr.mxu0 0.0
          %316 = vmatpush2.msra.mxu0 0.0
          %317 = vmatprep.subr.mxu0 0.0
          %318 = vmatpush2.msra.mxu0 0.0
          %319 = vmatprep.subr.mxu0 0.0
          %320 = vmatpush2.msra.mxu0 0.0
          %321 = vmatprep.subr.mxu0 0.0
          %322 = vmatpush2.msra.mxu0 0.0
          %323 = vmatprep.subr.mxu0 0.0
          %324 = vmatpush2.msra.mxu0 0.0
          %325 = vmatprep.subr.mxu0 0.0
          %326 = vmatpush2.msra.mxu0 0.0
          %327 = vmatprep.subr.mxu0 0.0
          %328 = vmatpush2.msra.mxu0 0.0
          %329 = vmatprep.subr.mxu0 0.0
          %330 = vmatpush2.msra.mxu0 0.0
          %331 = vmatprep.mubr.f32.mxu0 0.0
          %332 = vmatmul.mubr.f32.gmra.mxu0 %v250
          %v333 = vpop.f32.mrf.mxu0
          %v334 = vadd.f32 0.0, %v333
          %v335 = vpop.f32.mrf.mxu0
          %336 = vdwg.mxu0
          %s337 = scalar_lea.vmem %s202, 8 [#allocation5]
          %v338 = vld [vmem:[%s337] sm:$0xff]
          %v339 = vmul.f32 %v334, %v338
          %340 = vmatprep.subr.mxu0 0.0
          %341 = vmatpush1.xpose.msra.mxu0 0.0
          %342 = vmatprep.subr.mxu0 0.0
          %343 = vmatpush1.xpose.msra.mxu0 0.0
          %344 = vmatprep.subr.mxu0 0.0
          %345 = vmatpush1.xpose.msra.mxu0 0.0
          %346 = vmatprep.subr.mxu0 0.0
          %347 = vmatpush1.xpose.msra.mxu0 0.0
          %348 = vmatprep.subr.mxu0 0.0
          %349 = vmatpush1.xpose.msra.mxu0 0.0
          %350 = vmatprep.subr.mxu0 0.0
          %351 = vmatpush1.xpose.msra.mxu0 0.0
          %352 = vmatprep.subr.mxu0 0.0
          %353 = vmatpush1.xpose.msra.mxu0 0.0
          %354 = vmatprep.subr.mxu0 0.0
          %355 = vmatpush1.xpose.msra.mxu0 0.0
          %356 = vmatprep.subr.mxu0 0.0
          %357 = vmatpush1.xpose.msra.mxu0 0.0
          %358 = vmatprep.subr.mxu0 0.0
          %359 = vmatpush1.xpose.msra.mxu0 0.0
          %360 = vmatprep.subr.mxu0 0.0
          %361 = vmatpush1.xpose.msra.mxu0 0.0
          %362 = vmatprep.subr.mxu0 0.0
          %363 = vmatpush1.xpose.msra.mxu0 0.0
          %364 = vmatprep.subr.mxu0 0.0
          %365 = vmatpush1.xpose.msra.mxu0 0.0
          %366 = vmatprep.subr.mxu0 0.0
          %367 = vmatpush1.xpose.msra.mxu0 0.0
          %368 = vmatprep.subr.mxu0 0.0
          %369 = vmatpush1.xpose.msra.mxu0 0.0
          %370 = vmatprep.subr.mxu0 0.0
          %371 = vmatpush1.xpose.msra.mxu0 %v339
          %372 = vmatprep.subr.mxu0 0.0
          %373 = vmatpush2.xpose.msra.mxu0 0.0
          %374 = vmatprep.subr.mxu0 0.0
          %375 = vmatpush2.xpose.msra.mxu0 0.0
          %376 = vmatprep.subr.mxu0 0.0
          %377 = vmatpush2.xpose.msra.mxu0 0.0
          %378 = vmatprep.subr.mxu0 0.0
          %379 = vmatpush2.xpose.msra.mxu0 0.0
          %380 = vmatprep.subr.mxu0 0.0
          %381 = vmatpush2.xpose.msra.mxu0 0.0
          %382 = vmatprep.subr.mxu0 0.0
          %383 = vmatpush2.xpose.msra.mxu0 0.0
          %384 = vmatprep.subr.mxu0 0.0
          %385 = vmatpush2.xpose.msra.mxu0 0.0
          %386 = vmatprep.subr.mxu0 0.0
          %387 = vmatpush2.xpose.msra.mxu0 0.0
          %388 = vmatprep.subr.mxu0 0.0
          %389 = vmatpush2.xpose.msra.mxu0 0.0
          %390 = vmatprep.subr.mxu0 0.0
          %391 = vmatpush2.xpose.msra.mxu0 0.0
          %392 = vmatprep.subr.mxu0 0.0
          %393 = vmatpush2.xpose.msra.mxu0 0.0
          %394 = vmatprep.subr.mxu0 0.0
          %395 = vmatpush2.xpose.msra.mxu0 0.0
          %396 = vmatprep.subr.mxu0 0.0
          %397 = vmatpush2.xpose.msra.mxu0 0.0
          %398 = vmatprep.subr.mxu0 0.0
          %399 = vmatpush2.xpose.msra.mxu0 0.0
          %400 = vmatprep.subr.mxu0 0.0
          %401 = vmatpush2.xpose.msra.mxu0 0.0
          %402 = vmatprep.subr.mxu0 0.0
          %403 = vmatpush2.xpose.msra.mxu0 0.0
          %404 = vmatprep.mubr.f32.mxu0 0.0
          %405 = vmatmul.mubr.f32.gmra.mxu0 1.0
          %v406 = vpop.f32.mrf.mxu0
          %v407 = vadd.f32 0.0, %v406
          %v408 = vpop.f32.mrf.mxu0
          %409 = vdwg.mxu0
          %vm410 = vcmask 57344
          %411 = vst.msk [vmem:[%s235] sm:$0x1] %vm410, %v407
        $region40: #{tpu_custom_call.1} parent=27 // pred_fallthru
          _
        %p412 = scmp.ge.s32.totalorder %s31, %s245
        // Predicated region
        $region41: #{tpu_custom_call.1} parent=27 // pred_check
          %p413 = pneg %p412
        $region42: #{tpu_custom_call.1} parent=27 // pred_check_branch
          %415 = sbr.rel (%p413) target = $region44
        $region43: #{tpu_custom_call.1} parent=27 // pred_region
          %vm416 = vcmask 57344
          %417 = vst.msk [vmem:[%s235] sm:$0x1] %vm416, 0.0
        $region44: #{tpu_custom_call.1} parent=27 // pred_fallthru
          _
        %s418 = sand.u32 %s109, 1
        %s419 = scalar_lea.sflag [#allocation7], %s418
        %s420 = sand.u32 %s109, 1
        %s421 = scalar_lea.vmem [#allocation10], %s420
        // Predicated region
        $region45: #{tpu_custom_call.1} parent=27 // pred_check
          %p422 = pneg %p119
        $region46: #{tpu_custom_call.1} parent=27 // pred_check_branch
          %424 = sbr.rel (%p422) target = $region48
        $region47: #{tpu_custom_call.1} parent=27 // pred_region
          %s426 = ssub.s32 16, 16
          %427 = vsyncadd %s419, %s426
          %s428 = smul.addr %s31, 16
          %s429 = scalar_lea.hbm %s4, %s428
          %s431 = sshll.u32 %s421, 4
          %s432 = int_to_ptr.vmem [resolvable:$true] %s431
          %434 = dma.vmem_to_hbm [thread:$0]  %s432, 16, %s429, %s419
        $region48: #{tpu_custom_call.1} parent=27 // pred_fallthru
          _
      $region28: #{tpu_custom_call.1} parent=5 // pred_fallthru
        _
      %p435 = scmp.le.s32.totalorder 2, %s26
      // Predicated region
      $region49: #{tpu_custom_call.1} parent=5 // pred_check
        %p436 = pneg %p435
      $region50: #{tpu_custom_call.1} parent=5 // pred_check_branch
        %438 = sbr.rel (%p436) target = $region52
      $region51: #{tpu_custom_call.1} parent=5 // pred_region
        %s439 = ssub.s32 %s26, 2
        // Predicated region
        $region53: #{tpu_custom_call.1} parent=51 // pred_check
          %p440 = pneg %p125
        $region54: #{tpu_custom_call.1} parent=51 // pred_check_branch
          %442 = sbr.rel (%p440) target = $region56
        $region55: #{tpu_custom_call.1} parent=51 // pred_region
          %s443 = sand.u32 %s110, 1
          %s444 = scalar_lea.sflag [#allocation7], %s443
          %s445 = sand.u32 %s110, 1
          %s446 = scalar_lea.vmem [#allocation10], %s445
          %447 = dma.done %s444, 16
        $region56: #{tpu_custom_call.1} parent=51 // pred_fallthru
          _
      $region52: #{tpu_custom_call.1} parent=5 // pred_fallthru
        _
    $region6: #{tpu_custom_call.1} parent=1 // loop_footer
      %s30 = sadd.s32 1, %s26
    $region7: #{tpu_custom_call.1} parent=1 // loop_footer_branch
      %25 = sbr.rel target = $region3
    $region8: #{tpu_custom_call.1} parent=1 // loop_exit
      _
    %448 = vsyncpa [#allocation6], 1
    %s449 = scalar_lea.sflag [#allocation6], 1
    %450 = vsyncpa %s449, 1
    %451 = vsyncpa [#allocation9], 1
    %s452 = scalar_lea.sflag [#allocation9], 1
    %453 = vsyncpa %s452, 1
    %454 = vsyncpa [#allocation7], 1
    %s455 = scalar_lea.sflag [#allocation7], 1
    %456 = vsyncpa %s455, 1

</llo_original>
